<compile_context>
chip_gen: v5e
topology: v5e:2x2
jax: 0.10.0
libtpu: 0.0.40
codegen_flags: <defaults>
</compile_context>

<pallas_src>
import functools

import jax
import jax.numpy as jnp
from jax.experimental import pallas as pl
from jax.experimental.pallas import tpu as pltpu


def _channel_gate_kernel(x_ref, w1t_ref, b1_ref, w2t_ref, b2x2_ref, out_ref,
                         *, hw_valid):
    x = x_ref[...]          # (Nb, C, HWp) f32
    w1t = w1t_ref[...]      # (C, Cr)   == torch Linear1.weight.T
    b1 = b1_ref[...]        # (1, Cr)
    w2t = w2t_ref[...]      # (Cr, C)   == torch Linear2.weight.T
    b2x2 = b2x2_ref[...]    # (1, C)    == 2 * torch Linear2.bias

    hwp = x.shape[-1]

    # Global average pool (lane-axis reduction).  Zero padding on the lane
    # axis does not perturb the sum; divide by the true spatial size.
    avg = jnp.sum(x, axis=-1) * (1.0 / hw_valid)              # (Nb, C)

    # Global max pool; mask the pad lanes only if padding was added.
    if hwp != hw_valid:
        lane = jax.lax.broadcasted_iota(jnp.int32, x.shape, 2)
        xm = jnp.where(lane < hw_valid, x, jnp.finfo(x.dtype).min)
    else:
        xm = x
    mx = jnp.max(xm, axis=-1)                                 # (Nb, C)

    # Shared MLP applied to each pooled vector, results summed.  Since the
    # second layer is linear:
    #   (relu(a@W1^T+b1)@W2^T + b2) + (relu(m@W1^T+b1)@W2^T + b2)
    #     == (h_avg + h_max) @ W2^T + 2*b2
    h = (jnp.maximum(jnp.dot(avg, w1t, preferred_element_type=jnp.float32) + b1, 0.0)
         + jnp.maximum(jnp.dot(mx, w1t, preferred_element_type=jnp.float32) + b1, 0.0))
    att = jnp.dot(h, w2t, preferred_element_type=jnp.float32) + b2x2   # (Nb, C)

    scale = jax.nn.sigmoid(att)                               # (Nb, C)
    out_ref[...] = x * scale[:, :, None]                      # lane broadcast


def channel_gate(x, w1, b1, w2, b2, *, target_tile_bytes=2 << 20):
    """x: (N, C, H, W) f32; w1: (C//r, C); b1: (C//r,); w2: (C, C//r); b2: (C,)."""
    N, C, H, W = x.shape
    hw = H * W
    Cr = w1.shape[0]

    # Lane-dense last dim: pad H*W up to a multiple of 128.
    # (For shapes where hw << 128 a (N, hw, C) transpose with C on lanes would
    #  waste less bandwidth; padding keeps this version simple.)
    hw_pad = ((hw + 127) // 128) * 128
    x_flat = x.reshape(N, C, hw)
    if hw_pad != hw:
        x_flat = jnp.pad(x_flat, ((0, 0), (0, 0), (0, hw_pad - hw)))

    # Batch-block size Nb: target ~2 MiB per input tile (small tiles leave the
    # HBM-bound pipeline dominated by ~0.35us/step overhead), but keep the
    # grid length >= 2 when possible so the "parallel" batch axis can shard
    # across TensorCores (v7x megacore), and require Nb | N.
    slab_bytes = C * hw_pad * x.dtype.itemsize
    nb = max(1, min(N, target_tile_bytes // max(slab_bytes, 1)))
    while nb > 1 and N // nb < 2:
        nb //= 2
    while N % nb:
        nb -= 1

    # Explicit VMEM budget: double-buffered input + output tiles + weights,
    # capped at v7x's 64 MiB physical VMEM.
    tile_bytes = nb * slab_bytes
    weight_bytes = (C * Cr + Cr + Cr * C + C) * 4
    vmem_limit = int(min(64 * 1024 * 1024,
                         max(16 * 1024 * 1024,
                             4 * tile_bytes + 2 * weight_bytes + (2 << 20))))

    kernel = functools.partial(_channel_gate_kernel, hw_valid=hw)

    out_flat = pl.pallas_call(
        kernel,
        out_shape=jax.ShapeDtypeStruct((N, C, hw_pad), x.dtype),
        grid_spec=pltpu.PrefetchScalarGridSpec(
            num_scalar_prefetch=0,
            grid=(N // nb,),
            in_specs=[
                pl.BlockSpec((nb, C, hw_pad), lambda n: (n, 0, 0)),
                pl.BlockSpec((C, Cr), lambda n: (0, 0)),
                pl.BlockSpec((1, Cr), lambda n: (0, 0)),
                pl.BlockSpec((Cr, C), lambda n: (0, 0)),
                pl.BlockSpec((1, C), lambda n: (0, 0)),
            ],
            out_specs=pl.BlockSpec((nb, C, hw_pad), lambda n: (n, 0, 0)),
        ),
        compiler_params=pltpu.CompilerParams(
            dimension_semantics=("parallel",),
            vmem_limit_bytes=vmem_limit),
    )(x_flat, w1.T, b1.reshape(1, Cr), w2.T, (2.0 * b2).reshape(1, C))

    out = out_flat[:, :, :hw] if hw_pad != hw else out_flat
    return out.reshape(N, C, H, W)


def channel_gate_reference(x, w1, b1, w2, b2):
    """Plain-JAX reference matching the PyTorch forward (pool_types=['avg','max'])."""
    avg = jnp.mean(x, axis=(2, 3))            # (N, C)
    mx = jnp.max(x, axis=(2, 3))              # (N, C)

    def mlp(v):
        h = jnp.maximum(v @ w1.T + b1, 0.0)
        return h @ w2.T + b2

    att = mlp(avg) + mlp(mx)
    scale = jax.nn.sigmoid(att)[:, :, None, None]
    return x * scale


if __name__ == "__main__":
    # Module config: gate_channels=32, reduction_ratio=16 -> hidden = 2.
    N, C, H, W = 4, 32, 16, 16
    r = 16
    Cr = C // r

    key = jax.random.PRNGKey(0)
    kx, k1, k2, k3, k4 = jax.random.split(key, 5)

    x = jax.random.normal(kx, (N, C, H, W), dtype=jnp.float32)

    # Deterministic PyTorch-style (Kaiming-uniform-ish) Linear init.
    bound1 = 1.0 / jnp.sqrt(C)
    w1 = jax.random.uniform(k1, (Cr, C), jnp.float32, -bound1, bound1)
    b1 = jax.random.uniform(k2, (Cr,), jnp.float32, -bound1, bound1)
    bound2 = 1.0 / jnp.sqrt(Cr)
    w2 = jax.random.uniform(k3, (C, Cr), jnp.float32, -bound2, bound2)
    b2 = jax.random.uniform(k4, (C,), jnp.float32, -bound2, bound2)

    out = channel_gate(x, w1, b1, w2, b2)
    out = jax.block_until_ready(out)

    ref = channel_gate_reference(x, w1, b1, w2, b2)
    assert out.shape == (N, C, H, W)
    assert jnp.allclose(out, ref, atol=1e-5, rtol=1e-5), "mismatch vs reference"

    print("KERNEL_OK")
</pallas_src>

<mosaic_0001>
module attributes {stable_mosaic.version = 11 : i64} {
  func.func @_channel_gate_kernel(%arg0: i32, %arg1: memref<2x32x256xf32, #tpu.memory_space<vmem>>, %arg2: memref<32x2xf32, #tpu.memory_space<vmem>>, %arg3: memref<1x2xf32, #tpu.memory_space<vmem>>, %arg4: memref<2x32xf32, #tpu.memory_space<vmem>>, %arg5: memref<1x32xf32, #tpu.memory_space<vmem>>, %arg6: memref<2x32x256xf32, #tpu.memory_space<vmem>>) attributes {dimension_semantics = [#tpu.dimension_semantics<parallel>], iteration_bounds = array<i64: 2>, scalar_prefetch = 0 : i64, scratch_operands = 0 : i64, tpu.core_type = #tpu.core_type<tc>, window_params = [{transform_indices = @transform_0, window_bounds = array<i64: 2, 32, 256>}, {pipeline_mode = #tpu.pipeline_mode<synchronous>, transform_indices = @transform_1, window_bounds = array<i64: 32, 2>}, {pipeline_mode = #tpu.pipeline_mode<synchronous>, transform_indices = @transform_2, window_bounds = array<i64: 1, 2>}, {pipeline_mode = #tpu.pipeline_mode<synchronous>, transform_indices = @transform_3, window_bounds = array<i64: 2, 32>}, {pipeline_mode = #tpu.pipeline_mode<synchronous>, transform_indices = @transform_4, window_bounds = array<i64: 1, 32>}, {transform_indices = @transform_5, window_bounds = array<i64: 2, 32, 256>}]} {
    %c0 = arith.constant 0 : index
    %c0_0 = arith.constant 0 : index
    %c0_1 = arith.constant 0 : index
    %0 = vector.load %arg1[%c0, %c0_0, %c0_1] : memref<2x32x256xf32, #tpu.memory_space<vmem>>, vector<2x32x256xf32>
    %c0_2 = arith.constant 0 : index
    %c0_3 = arith.constant 0 : index
    %1 = vector.load %arg2[%c0_2, %c0_3] : memref<32x2xf32, #tpu.memory_space<vmem>>, vector<32x2xf32>
    %c0_4 = arith.constant 0 : index
    %c0_5 = arith.constant 0 : index
    %2 = vector.load %arg3[%c0_4, %c0_5] : memref<1x2xf32, #tpu.memory_space<vmem>>, vector<1x2xf32>
    %c0_6 = arith.constant 0 : index
    %c0_7 = arith.constant 0 : index
    %3 = vector.load %arg4[%c0_6, %c0_7] : memref<2x32xf32, #tpu.memory_space<vmem>>, vector<2x32xf32>
    %c0_8 = arith.constant 0 : index
    %c0_9 = arith.constant 0 : index
    %4 = vector.load %arg5[%c0_8, %c0_9] : memref<1x32xf32, #tpu.memory_space<vmem>>, vector<1x32xf32>
    %cst = arith.constant dense<0.000000e+00> : vector<2x32xf32>
    %5 = vector.multi_reduction <add>, %0, %cst [2] : vector<2x32x256xf32> to vector<2x32xf32>
    %cst_10 = arith.constant 3.906250e-03 : f32
    %6 = vector.broadcast %cst_10 : f32 to vector<2x32xf32>
    %7 = arith.mulf %5, %6 : vector<2x32xf32>
    %cst_11 = arith.constant dense<0xFF800000> : vector<2x32xf32>
    %8 = vector.multi_reduction <maximumf>, %0, %cst_11 [2] : vector<2x32x256xf32> to vector<2x32xf32>
    %cst_12 = arith.constant dense<0.000000e+00> : vector<2x2xf32>
    %9 = tpu.matmul %7, %1, %cst_12 {dimension_numbers = #tpu.dot_dimension_numbers<[1], [0], [0], [1], [0, 0, 1, 1], [], []>} : vector<2x32xf32>, vector<32x2xf32>, vector<2x2xf32> -> vector<2x2xf32>
    %10 = vector.broadcast %2 : vector<1x2xf32> to vector<2x2xf32>
    %11 = arith.addf %9, %10 : vector<2x2xf32>
    %cst_13 = arith.constant 0.000000e+00 : f32
    %12 = vector.broadcast %cst_13 : f32 to vector<2x2xf32>
    %13 = arith.maximumf %11, %12 : vector<2x2xf32>
    %cst_14 = arith.constant dense<0.000000e+00> : vector<2x2xf32>
    %14 = tpu.matmul %8, %1, %cst_14 {dimension_numbers = #tpu.dot_dimension_numbers<[1], [0], [0], [1], [0, 0, 1, 1], [], []>} : vector<2x32xf32>, vector<32x2xf32>, vector<2x2xf32> -> vector<2x2xf32>
    %15 = vector.broadcast %2 : vector<1x2xf32> to vector<2x2xf32>
    %16 = arith.addf %14, %15 : vector<2x2xf32>
    %cst_15 = arith.constant 0.000000e+00 : f32
    %17 = vector.broadcast %cst_15 : f32 to vector<2x2xf32>
    %18 = arith.maximumf %16, %17 : vector<2x2xf32>
    %19 = arith.addf %13, %18 : vector<2x2xf32>
    %cst_16 = arith.constant dense<0.000000e+00> : vector<2x32xf32>
    %20 = tpu.matmul %19, %3, %cst_16 {dimension_numbers = #tpu.dot_dimension_numbers<[1], [0], [0], [1], [0, 0, 1, 1], [], []>} : vector<2x2xf32>, vector<2x32xf32>, vector<2x32xf32> -> vector<2x32xf32>
    %21 = vector.broadcast %4 : vector<1x32xf32> to vector<2x32xf32>
    %22 = arith.addf %20, %21 : vector<2x32xf32>
    %23 = arith.negf %22 : vector<2x32xf32>
    %24 = math.exp %23 : vector<2x32xf32>
    %cst_17 = arith.constant 1.000000e+00 : f32
    %25 = vector.broadcast %cst_17 : f32 to vector<2x32xf32>
    %26 = arith.addf %25, %24 : vector<2x32xf32>
    %27 = arith.divf %25, %26 : vector<2x32xf32>
    %28 = vector.shape_cast %27 : vector<2x32xf32> to vector<2x32x1xf32>
    %29 = vector.broadcast %28 : vector<2x32x1xf32> to vector<2x32x256xf32>
    %30 = arith.mulf %0, %29 : vector<2x32x256xf32>
    %c0_18 = arith.constant 0 : index
    %c0_19 = arith.constant 0 : index
    %c0_20 = arith.constant 0 : index
    %31 = vector.load %arg6[%c0_18, %c0_19, %c0_20] : memref<2x32x256xf32, #tpu.memory_space<vmem>>, vector<2x32x256xf32>
    tpu.vector_store %arg6[%c0_18, %c0_19, %c0_20], %30 {strides = array<i32>} : memref<2x32x256xf32, #tpu.memory_space<vmem>>, vector<2x32x256xf32>,
    return
  }
  func.func @transform_0(%arg0: i32) -> (i32, i32, i32) {
    %c0_i32 = arith.constant 0 : i32
    %c0_i32_0 = arith.constant 0 : i32
    %c0_i32_1 = arith.constant 0 : i32
    return %arg0, %c0_i32, %c0_i32_0 : i32, i32, i32
  }
  func.func @transform_1(%arg0: i32) -> (i32, i32) {
    %c0_i32 = arith.constant 0 : i32
    %c0_i32_0 = arith.constant 0 : i32
    %c0_i32_1 = arith.constant 0 : i32
    return %c0_i32, %c0_i32_0 : i32, i32
  }
  func.func @transform_2(%arg0: i32) -> (i32, i32) {
    %c0_i32 = arith.constant 0 : i32
    %c0_i32_0 = arith.constant 0 : i32
    %c0_i32_1 = arith.constant 0 : i32
    return %c0_i32, %c0_i32_0 : i32, i32
  }
  func.func @transform_3(%arg0: i32) -> (i32, i32) {
    %c0_i32 = arith.constant 0 : i32
    %c0_i32_0 = arith.constant 0 : i32
    %c0_i32_1 = arith.constant 0 : i32
    return %c0_i32, %c0_i32_0 : i32, i32
  }
  func.func @transform_4(%arg0: i32) -> (i32, i32) {
    %c0_i32 = arith.constant 0 : i32
    %c0_i32_0 = arith.constant 0 : i32
    %c0_i32_1 = arith.constant 0 : i32
    return %c0_i32, %c0_i32_0 : i32, i32
  }
  func.func @transform_5(%arg0: i32) -> (i32, i32, i32) {
    %c0_i32 = arith.constant 0 : i32
    %c0_i32_0 = arith.constant 0 : i32
    %c0_i32_1 = arith.constant 0 : i32
    return %arg0, %c0_i32, %c0_i32_0 : i32, i32, i32
  }
}

</mosaic_0001>

<llo_original>
// kernel: tpu_custom_call.1
$region0: #{tpu_custom_call.1}
  #allocation0 [shape = 'u32[]', space=smem, size = 0x4, offset = 0x4, fixed_abs, tag = 'smem constant byte address 0x4 - core index']
  #allocation1 [shape = 'u32[72,128]{1,0:T(1,128)}', space=vmem, size = 0x9000, scoped, tag = 'internal scratch']
  %s0 = inlined_call_operand.hbm [shape: f32[4,32,256], index: 0, kind: input, shape index: {}]
  %s1 = inlined_call_operand.vmem [shape: f32[32,2], index: 1, kind: input, shape index: {}]
  %s2 = inlined_call_operand.vmem [shape: f32[1,2], index: 2, kind: input, shape index: {}]
  %s3 = inlined_call_operand.vmem [shape: f32[2,32], index: 3, kind: input, shape index: {}]
  %s4 = inlined_call_operand.vmem [shape: f32[1,32], index: 4, kind: input, shape index: {}]
  %s5 = inlined_call_operand.hbm [shape: f32[4,32,256], index: 5, kind: output, shape index: {}]
  %s6 = sld [smem:[#allocation0]]
  $region57: #{tpu_custom_call.1} parent=0
    _
  %s8 = ssub.s32 1, %s6
  %s9 = scalar_select 0, %s8, %s6
  $region1: #{tpu_custom_call.1} parent=0
    #allocation2 [shape = 'u8[131072]{0}', space=vmem, size = 0x20000, scoped, tag = 'input window, operand 0']
    #allocation3 [shape = 's32[2]{0}', space=sflag, size = 0x8, scoped, tag = 'scoped memory for tpu_custom_call.1']
    #allocation4 [shape = 's32[2]{0}', space=sflag, size = 0x8, scoped, tag = 'scoped memory for tpu_custom_call.1']
    #allocation5 [shape = 'u8[131072]{0}', space=vmem, size = 0x20000, scoped, tag = 'output window, operand 0']
    %10 = vsyncpa [#allocation3], 0
    %s11 = scalar_lea.sflag [#allocation3], 1
    %12 = vsyncpa %s11, 0
    %13 = vsyncpa [#allocation4], 0
    %s14 = scalar_lea.sflag [#allocation4], 1
    %15 = vsyncpa %s14, 0
    loop: start=0, step=1, limit=4
    $region2: #{tpu_custom_call.1} parent=1 // loop_pre_header
      _
    $region3: #{tpu_custom_call.1} parent=1 // loop_header
      %s17 = sphi 0, %s21
      %p18 = scmp.ge.s32.totalorder %s17, 4
      %s27 = sphi 0, %s29
      %s30 = sphi 0, %s27
      %s31 = sphi 0, %s30
      %s47 = sphi 0, %s31
      %s51 = sphi 0, %s51
      %s53 = sphi 0, %s51
      %s54 = sphi 0, %s53
      %s68 = sphi 0, %s54
      %s72 = sphi 0, %s72
      %s74 = sphi 0, %s72
      %s75 = sphi 0, %s74
      %s89 = sphi 0, %s75
      %s93 = sphi 0, %s93
      %s95 = sphi 0, %s93
      %s96 = sphi 0, %s95
      %s110 = sphi 0, %s96
      %s114 = sphi 0, %s114
      %s116 = sphi 0, %s114
      %s117 = sphi 0, %s116
      %s131 = sphi 0, %s117
      %s137 = sphi 0, %s139
      %s140 = sphi 0, %s137
      %s141 = sphi 0, %s140
      %s157 = sphi 0, %s141
    $region4: #{tpu_custom_call.1} parent=1 // loop_header_branch
      %20 = sbr.rel (%p18) target = $region8
    $region5: #{tpu_custom_call.1} parent=1 // loop_body
      %s22 = ssub.s32 %s17, 1
      %s23 = ssub.s32 %s17, 2
      %s24 = sadd.s32 %s17, 1
      %s25 = ssub.s32 %s17, %s24
      %p26 = scmp.eq.s32.totalorder %s25, 0
      %s28 = sadd.s32 %s27, 1
      %s29 = scalar_select %p26, %s27, %s28
      %p32 = pneg %p26
      %p33 = scmp.eq.s32.totalorder %s17, 1
      %p34 = por %p32, %p33
      %p35 = scmp.ne.s32.totalorder %s27, %s30
      %p36 = scmp.eq.s32.totalorder %s17, 0
      %p37 = por %p35, %p36
      %p38 = scmp.ne.s32.totalorder %s27, %s30
      %p39 = scmp.eq.s32.totalorder %s22, 1
      %p40 = por %p38, %p39
      %p41 = scmp.ne.s32.totalorder %s30, %s31
      %p42 = scmp.eq.s32.totalorder %s22, 0
      %p43 = por %p41, %p42
      %p44 = scmp.ne.s32.totalorder %s30, %s31
      %p45 = scmp.eq.s32.totalorder %s23, 1
      %p46 = por %p44, %p45
      %p48 = scmp.ne.s32.totalorder %s31, %s47
      %p49 = scmp.eq.s32.totalorder %s23, 0
      %p50 = por %p48, %p49
      %s52 = sadd.s32 %s51, 1
      %p55 = scmp.eq.s32.totalorder %s17, 1
      %p56 = scmp.ne.s32.totalorder %s51, %s53
      %p57 = scmp.eq.s32.totalorder %s17, 0
      %p58 = por %p56, %p57
      %p59 = scmp.ne.s32.totalorder %s51, %s53
      %p60 = scmp.eq.s32.totalorder %s22, 1
      %p61 = por %p59, %p60
      %p62 = scmp.ne.s32.totalorder %s53, %s54
      %p63 = scmp.eq.s32.totalorder %s22, 0
      %p64 = por %p62, %p63
      %p65 = scmp.ne.s32.totalorder %s53, %s54
      %p66 = scmp.eq.s32.totalorder %s23, 1
      %p67 = por %p65, %p66
      %p69 = scmp.ne.s32.totalorder %s54, %s68
      %p70 = scmp.eq.s32.totalorder %s23, 0
      %p71 = por %p69, %p70
      %s73 = sadd.s32 %s72, 1
      %p76 = scmp.eq.s32.totalorder %s17, 1
      %p77 = scmp.ne.s32.totalorder %s72, %s74
      %p78 = scmp.eq.s32.totalorder %s17, 0
      %p79 = por %p77, %p78
      %p80 = scmp.ne.s32.totalorder %s72, %s74
      %p81 = scmp.eq.s32.totalorder %s22, 1
      %p82 = por %p80, %p81
      %p83 = scmp.ne.s32.totalorder %s74, %s75
      %p84 = scmp.eq.s32.totalorder %s22, 0
      %p85 = por %p83, %p84
      %p86 = scmp.ne.s32.totalorder %s74, %s75
      %p87 = scmp.eq.s32.totalorder %s23, 1
      %p88 = por %p86, %p87
      %p90 = scmp.ne.s32.totalorder %s75, %s89
      %p91 = scmp.eq.s32.totalorder %s23, 0
      %p92 = por %p90, %p91
      %s94 = sadd.s32 %s93, 1
      %p97 = scmp.eq.s32.totalorder %s17, 1
      %p98 = scmp.ne.s32.totalorder %s93, %s95
      %p99 = scmp.eq.s32.totalorder %s17, 0
      %p100 = por %p98, %p99
      %p101 = scmp.ne.s32.totalorder %s93, %s95
      %p102 = scmp.eq.s32.totalorder %s22, 1
      %p103 = por %p101, %p102
      %p104 = scmp.ne.s32.totalorder %s95, %s96
      %p105 = scmp.eq.s32.totalorder %s22, 0
      %p106 = por %p104, %p105
      %p107 = scmp.ne.s32.totalorder %s95, %s96
      %p108 = scmp.eq.s32.totalorder %s23, 1
      %p109 = por %p107, %p108
      %p111 = scmp.ne.s32.totalorder %s96, %s110
      %p112 = scmp.eq.s32.totalorder %s23, 0
      %p113 = por %p111, %p112
      %s115 = sadd.s32 %s114, 1
      %p118 = scmp.eq.s32.totalorder %s17, 1
      %p119 = scmp.ne.s32.totalorder %s114, %s116
      %p120 = scmp.eq.s32.totalorder %s17, 0
      %p121 = por %p119, %p120
      %p122 = scmp.ne.s32.totalorder %s114, %s116
      %p123 = scmp.eq.s32.totalorder %s22, 1
      %p124 = por %p122, %p123
      %p125 = scmp.ne.s32.totalorder %s116, %s117
      %p126 = scmp.eq.s32.totalorder %s22, 0
      %p127 = por %p125, %p126
      %p128 = scmp.ne.s32.totalorder %s116, %s117
      %p129 = scmp.eq.s32.totalorder %s23, 1
      %p130 = por %p128, %p129
      %p132 = scmp.ne.s32.totalorder %s117, %s131
      %p133 = scmp.eq.s32.totalorder %s23, 0
      %p134 = por %p132, %p133
      %s135 = ssub.s32 %s17, %s24
      %p136 = scmp.eq.s32.totalorder %s135, 0
      %s138 = sadd.s32 %s137, 1
      %s139 = scalar_select %p136, %s137, %s138
      %p142 = pneg %p136
      %p143 = scmp.eq.s32.totalorder %s17, 1
      %p144 = por %p142, %p143
      %p145 = scmp.ne.s32.totalorder %s137, %s140
      %p146 = scmp.eq.s32.totalorder %s17, 0
      %p147 = por %p145, %p146
      %p148 = scmp.ne.s32.totalorder %s137, %s140
      %p149 = scmp.eq.s32.totalorder %s22, 1
      %p150 = por %p148, %p149
      %p151 = scmp.ne.s32.totalorder %s140, %s141
      %p152 = scmp.eq.s32.totalorder %s22, 0
      %p153 = por %p151, %p152
      %p154 = scmp.ne.s32.totalorder %s140, %s141
      %p155 = scmp.eq.s32.totalorder %s23, 1
      %p156 = por %p154, %p155
      %p158 = scmp.ne.s32.totalorder %s141, %s157
      %p159 = scmp.eq.s32.totalorder %s23, 0
      %p160 = por %p158, %p159
      %p161 = scmp.le.s32.totalorder 1, %s17
      %p162 = scmp.lt.s32.totalorder %s17, 3
      %p163 = pnand %p161, %p162
      %p164 = pneg %p163
      // Predicated region
      $region9: #{tpu_custom_call.1} parent=5 // pred_check
        _
      $region10: #{tpu_custom_call.1} parent=5 // pred_check_branch
        %166 = sbr.rel (%p163) target = $region12
      $region11: #{tpu_custom_call.1} parent=5 // pred_region
        %s167 = ssub.s32 %s17, 1
        // Predicated region
        $region13: #{tpu_custom_call.1} parent=11 // pred_check
          %p168 = pneg %p64
        $region14: #{tpu_custom_call.1} parent=11 // pred_check_branch
          %170 = sbr.rel (%p168) target = $region16
        $region15: #{tpu_custom_call.1} parent=11 // pred_region
          _
        $region16: #{tpu_custom_call.1} parent=11 // pred_fallthru
          _
        // Predicated region
        $region17: #{tpu_custom_call.1} parent=11 // pred_check
          %p171 = pneg %p85
        $region18: #{tpu_custom_call.1} parent=11 // pred_check_branch
          %173 = sbr.rel (%p171) target = $region20
        $region19: #{tpu_custom_call.1} parent=11 // pred_region
          _
        $region20: #{tpu_custom_call.1} parent=11 // pred_fallthru
          _
        // Predicated region
        $region21: #{tpu_custom_call.1} parent=11 // pred_check
          %p174 = pneg %p106
        $region22: #{tpu_custom_call.1} parent=11 // pred_check_branch
          %176 = sbr.rel (%p174) target = $region24
        $region23: #{tpu_custom_call.1} parent=11 // pred_region
          _
        $region24: #{tpu_custom_call.1} parent=11 // pred_fallthru
          _
        // Predicated region
        $region25: #{tpu_custom_call.1} parent=11 // pred_check
          %p177 = pneg %p127
        $region26: #{tpu_custom_call.1} parent=11 // pred_check_branch
          %179 = sbr.rel (%p177) target = $region28
        $region27: #{tpu_custom_call.1} parent=11 // pred_region
          _
        $region28: #{tpu_custom_call.1} parent=11 // pred_fallthru
          _
      $region12: #{tpu_custom_call.1} parent=5 // pred_fallthru
        _
      %p180 = scmp.lt.s32.totalorder %s17, 2
      // Predicated region
      $region29: #{tpu_custom_call.1} parent=5 // pred_check
        %p181 = pneg %p180
      $region30: #{tpu_custom_call.1} parent=5 // pred_check_branch
        %183 = sbr.rel (%p181) target = $region32
      $region31: #{tpu_custom_call.1} parent=5 // pred_region
        // Predicated region
        $region33: #{tpu_custom_call.1} parent=31 // pred_check
          %p184 = pneg %p37
        $region34: #{tpu_custom_call.1} parent=31 // pred_check_branch
          %186 = sbr.rel (%p184) target = $region36
        $region35: #{tpu_custom_call.1} parent=31 // pred_region
          %s187 = sand.u32 %s27, 1
          %s188 = scalar_lea.sflag [#allocation3], %s187
          %s189 = sand.u32 %s27, 1
          %s190 = smul.addr %s189, 128
          %s191 = scalar_lea.vmem [#allocation2], %s190
          %s192 = smul.u32 2, %s17
          %194 = vsyncadd %s188, 0
          %s195 = smul.addr %s192, 8
          %s196 = smul.addr %s195, 8
          %s197 = scalar_lea.hbm %s0, %s196
          %s198 = sshll.u32 %s197, 4
          %s199 = int_to_ptr.hbm [resolvable:$true] %s198
          %s200 = sshll.u32 %s191, 4
          %s201 = int_to_ptr.vmem [resolvable:$true] %s200
          %206 = dma.hbm_to_vmem [thread:$0]  %s199, 2048, %s201, %s188, 256, 256, 16
        $region36: #{tpu_custom_call.1} parent=31 // pred_fallthru
          _
      $region32: #{tpu_custom_call.1} parent=5 // pred_fallthru
        _
      %p207 = scmp.le.s32.totalorder 1, %s17
      %p208 = scmp.lt.s32.totalorder %s17, 3
      %p209 = pnand %p207, %p208
      %p210 = pneg %p209
      // Predicated region
      $region37: #{tpu_custom_call.1} parent=5 // pred_check
        _
      $region38: #{tpu_custom_call.1} parent=5 // pred_check_branch
        %212 = sbr.rel (%p209) target = $region40
      $region39: #{tpu_custom_call.1} parent=5 // pred_region
        %s213 = ssub.s32 %s17, 1
        %s214 = sand.u32 %s30, 1
        %s215 = scalar_lea.sflag [#allocation3], %s214
        %s216 = sand.u32 %s30, 1
        %s217 = smul.addr %s216, 128
        %s218 = scalar_lea.vmem [#allocation2], %s217
        // Predicated region
        $region41: #{tpu_custom_call.1} parent=39 // pred_check
          %p219 = pneg %p43
        $region42: #{tpu_custom_call.1} parent=39 // pred_check_branch
          %221 = sbr.rel (%p219) target = $region44
        $region43: #{tpu_custom_call.1} parent=39 // pred_region
          %223 = dma.done %s215, 2048
        $region44: #{tpu_custom_call.1} parent=39 // pred_fallthru
          _
        %s224 = sand.u32 %s30, 1
        %s225 = scalar_lea.sflag [#allocation3], %s224
        %s226 = sand.u32 %s30, 1
        %s227 = smul.addr %s226, 128
        %s228 = scalar_lea.vmem [#allocation2], %s227
        %p229 = pneg %p43
        %p230 = pneg %p40
        %p231 = pneg %p64
        %p232 = pneg %p61
        %p233 = pneg %p85
        %p234 = pneg %p82
        %p235 = pneg %p106
        %p236 = pneg %p103
        %p237 = pneg %p127
        %p238 = pneg %p124
        %p239 = pneg %p153
        %p240 = pneg %p150
        %s241 = sand.u32 %s140, 1
        %s242 = scalar_lea.sflag [#allocation4], %s241
        %s243 = sand.u32 %s140, 1
        %s244 = smul.addr %s243, 128
        %s245 = scalar_lea.vmem [#allocation5], %s244
        %s246 = smul.u32 2, %s22
        %s247 = smul.u32 2, %s22
        %v248 = vld [vmem:[%s218] sm:$0xff]
        %v249 = vld [vmem:[%s218 + $0x8] sm:$0xff]
        %v250 = vld [vmem:[%s218 + $0x10] sm:$0xff]
        %v251 = vld [vmem:[%s218 + $0x18] sm:$0xff]
        %v252 = vld [vmem:[%s218 + $0x20] sm:$0xff]
        %v253 = vld [vmem:[%s218 + $0x28] sm:$0xff]
        %v254 = vld [vmem:[%s218 + $0x30] sm:$0xff]
        %v255 = vld [vmem:[%s218 + $0x38] sm:$0xff]
        %v256 = vld [vmem:[%s218 + $0x40] sm:$0xff]
        %v257 = vld [vmem:[%s218 + $0x48] sm:$0xff]
        %v258 = vld [vmem:[%s218 + $0x50] sm:$0xff]
        %v259 = vld [vmem:[%s218 + $0x58] sm:$0xff]
        %v260 = vld [vmem:[%s218 + $0x60] sm:$0xff]
        %v261 = vld [vmem:[%s218 + $0x68] sm:$0xff]
        %v262 = vld [vmem:[%s218 + $0x70] sm:$0xff]
        %v263 = vld [vmem:[%s218 + $0x78] sm:$0xff]
        %v264 = vld [vmem:[%s1] sm:$0xff]
        %v265 = vld [vmem:[%s1 + $0x8] sm:$0xff]
        %v266 = vld [vmem:[%s1 + $0x10] sm:$0xff]
        %v267 = vld [vmem:[%s1 + $0x18] sm:$0xff]
        %v268 = vld [vmem:[%s2] sm:$0x1]
        %v269 = vld [vmem:[%s3] sm:$0x3]
        %v270 = vld [vmem:[%s4] sm:$0x1]
        %v271 = vadd.f32 %v248, %v249
        %272 = vadd.xlane.f32.xlu0 %v271
        %v273 = vpop.xlane.xlu0 %272
        %v274 = vadd.f32 %v250, %v251
        %275 = vadd.xlane.f32.xlu0 %v274
        %v276 = vpop.xlane.xlu0 %275
        %v277 = vadd.f32 %v252, %v253
        %278 = vadd.xlane.f32.xlu0 %v277
        %v279 = vpop.xlane.xlu0 %278
        %v280 = vadd.f32 %v254, %v255
        %281 = vadd.xlane.f32.xlu0 %v280
        %v282 = vpop.xlane.xlu0 %281
        %v283 = vadd.f32 %v256, %v257
        %284 = vadd.xlane.f32.xlu0 %v283
        %v285 = vpop.xlane.xlu0 %284
        %v286 = vadd.f32 %v258, %v259
        %287 = vadd.xlane.f32.xlu0 %v286
        %v288 = vpop.xlane.xlu0 %287
        %v289 = vadd.f32 %v260, %v261
        %290 = vadd.xlane.f32.xlu0 %v289
        %v291 = vpop.xlane.xlu0 %290
        %v292 = vadd.f32 %v262, %v263
        %293 = vadd.xlane.f32.xlu0 %v292
        %v294 = vpop.xlane.xlu0 %293
        %v295 = vmul.f32 %v273, 0.00390625
        %v296 = vmul.f32 %v276, 0.00390625
        %v297 = vmul.f32 %v279, 0.00390625
        %v298 = vmul.f32 %v282, 0.00390625
        %v299 = vmul.f32 %v285, 0.00390625
        %v300 = vmul.f32 %v288, 0.00390625
        %v301 = vmul.f32 %v291, 0.00390625
        %v302 = vmul.f32 %v294, 0.00390625
        %v303 = vmax.f32 %v248, %v249
        %304 = vmax.xlane.f32.xlu0 %v303
        %v305 = vpop.xlane.xlu0 %304
        %v306 = vmax.f32 %v250, %v251
        %307 = vmax.xlane.f32.xlu0 %v306
        %v308 = vpop.xlane.xlu0 %307
        %v309 = vmax.f32 %v252, %v253
        %310 = vmax.xlane.f32.xlu0 %v309
        %v311 = vpop.xlane.xlu0 %310
        %v312 = vmax.f32 %v254, %v255
        %313 = vmax.xlane.f32.xlu0 %v312
        %v314 = vpop.xlane.xlu0 %313
        %v315 = vmax.f32 %v256, %v257
        %316 = vmax.xlane.f32.xlu0 %v315
        %v317 = vpop.xlane.xlu0 %316
        %v318 = vmax.f32 %v258, %v259
        %319 = vmax.xlane.f32.xlu0 %v318
        %v320 = vpop.xlane.xlu0 %319
        %v321 = vmax.f32 %v260, %v261
        %322 = vmax.xlane.f32.xlu0 %v321
        %v323 = vpop.xlane.xlu0 %322
        %v324 = vmax.f32 %v262, %v263
        %325 = vmax.xlane.f32.xlu0 %v324
        %v326 = vpop.xlane.xlu0 %325
        %v328 = vperm.slane %v268, 0
        %v338 = vlaneseq
        %v339 = vand.u32 %v338, 127
        %v340 = vperm.slane %v295, %v339
        %v341 = vadd.s32 %v339, 4294967288
        %v342 = vperm.slane %v296, %v341
        %vm343 = vcmask 130112
        %v344 = vsel %vm343, %v342, %v340
        %v345 = vadd.s32 %v339, 4294967280
        %v346 = vperm.slane %v297, %v345
        %vm347 = vcmask 195712
        %v348 = vsel %vm347, %v346, %v344
        %v349 = vadd.s32 %v339, 4294967272
        %v350 = vperm.slane %v298, %v349
        %vm351 = vcmask 261312
        %v352 = vsel %vm351, %v350, %v348
        %v353 = vperm.slane %v299, %v339
        %v354 = vperm.slane %v300, %v341
        %v355 = vsel %vm343, %v354, %v353
        %v356 = vperm.slane %v301, %v345
        %v357 = vsel %vm347, %v356, %v355
        %v358 = vperm.slane %v302, %v349
        %v359 = vsel %vm351, %v358, %v357
        %vm360 = vcmask 1041409
        %v361 = vsel %vm360, %v359, %v352
        %vm362 = vcmask 261120
        %v363 = vsel %vm362, %v361, 0
        %365 = vmatpush.msra.mxu0 0.0
        %366 = vmatpush.msra.mxu0 0.0
        %367 = vmatpush.msra.mxu0 0.0
        %368 = vmatpush.msra.mxu0 0.0
        %369 = vmatpush.msra.mxu0 0.0
        %370 = vmatpush.msra.mxu0 0.0
        %371 = vmatpush.msra.mxu0 0.0
        %372 = vmatpush.msra.mxu0 0.0
        %373 = vmatpush.msra.mxu0 0.0
        %374 = vmatpush.msra.mxu0 0.0
        %375 = vmatpush.msra.mxu0 0.0
        %376 = vmatpush.msra.mxu0 0.0
        %377 = vmatpush.msra.mxu0 %v267
        %378 = vmatpush.msra.mxu0 %v266
        %379 = vmatpush.msra.mxu0 %v265
        %380 = vmatpush.msra.mxu0 %v264
        %381 = vmatmul.f32.gmra.mxu0 %v363
        %v382 = vpop.f32.mrf.mxu0
        %v383 = vadd.f32 %v328, %v382
        %384 = vdwg.mxu0
        %v385 = vmax.f32 %v383, 0.0
        %v394 = vperm.slane %v305, %v339
        %v395 = vperm.slane %v308, %v341
        %v396 = vsel %vm343, %v395, %v394
        %v397 = vperm.slane %v311, %v345
        %v398 = vsel %vm347, %v397, %v396
        %v399 = vperm.slane %v314, %v349
        %v400 = vsel %vm351, %v399, %v398
        %v401 = vperm.slane %v317, %v339
        %v402 = vperm.slane %v320, %v341
        %v403 = vsel %vm343, %v402, %v401
        %v404 = vperm.slane %v323, %v345
        %v405 = vsel %vm347, %v404, %v403
        %v406 = vperm.slane %v326, %v349
        %v407 = vsel %vm351, %v406, %v405
        %v408 = vsel %vm360, %v407, %v400
        %v409 = vsel %vm362, %v408, 0
        %411 = vmatpush.msra.mxu0 0.0
        %412 = vmatpush.msra.mxu0 0.0
        %413 = vmatpush.msra.mxu0 0.0
        %414 = vmatpush.msra.mxu0 0.0
        %415 = vmatpush.msra.mxu0 0.0
        %416 = vmatpush.msra.mxu0 0.0
        %417 = vmatpush.msra.mxu0 0.0
        %418 = vmatpush.msra.mxu0 0.0
        %419 = vmatpush.msra.mxu0 0.0
        %420 = vmatpush.msra.mxu0 0.0
        %421 = vmatpush.msra.mxu0 0.0
        %422 = vmatpush.msra.mxu0 0.0
        %423 = vmatpush.msra.mxu0 %v267
        %424 = vmatpush.msra.mxu0 %v266
        %425 = vmatpush.msra.mxu0 %v265
        %426 = vmatpush.msra.mxu0 %v264
        %427 = vmatmul.f32.gmra.mxu0 %v409
        %v428 = vpop.f32.mrf.mxu0
        %v429 = vadd.f32 %v328, %v428
        %430 = vdwg.mxu0
        %v431 = vmax.f32 %v429, 0.0
        %v432 = vadd.f32 %v385, %v431
        %v434 = vperm.slane %v270, 0
        %vm436 = vcmask 15360
        %v438 = vsel %vm436, %v432, 0
        %vm440 = vcmask 1041408
        %v442 = vsel %vm440, %v269, 0
        %444 = vmatpush.msra.mxu0 0.0
        %445 = vmatpush.msra.mxu0 0.0
        %446 = vmatpush.msra.mxu0 0.0
        %447 = vmatpush.msra.mxu0 0.0
        %448 = vmatpush.msra.mxu0 0.0
        %449 = vmatpush.msra.mxu0 0.0
        %450 = vmatpush.msra.mxu0 0.0
        %451 = vmatpush.msra.mxu0 0.0
        %452 = vmatpush.msra.mxu0 0.0
        %453 = vmatpush.msra.mxu0 0.0
        %454 = vmatpush.msra.mxu0 0.0
        %455 = vmatpush.msra.mxu0 0.0
        %456 = vmatpush.msra.mxu0 0.0
        %457 = vmatpush.msra.mxu0 0.0
        %458 = vmatpush.msra.mxu0 0.0
        %459 = vmatpush.msra.mxu0 %v442
        %460 = vmatmul.f32.gmra.mxu0 %v438
        %v461 = vpop.f32.mrf.mxu0
        %v462 = vadd.f32 %v434, %v461
        %463 = vdwg.mxu0
        %v464 = vxor.u32 %v462, 2147483648
        %v465 = vmul.f32 %v464, 1.442695
        %v466 = vpow.pop %v465
        %v467 = vadd.f32 %v466, 1.0
        %v468 = vrcp.pop %v467
        %v469 = vmul.f32 %v467, %v468
        %v470 = vsub.f32 1.0, %v469
        %v471 = vmul.f32 %v468, %v470
        %v472 = vadd.f32 %v468, %v471
        %vm473 = vweird.f32 %v467
        %vm474 = vweird.f32 %v468
        %vm475 = vmor %vm473, %vm474
        %v476 = vsel %vm475, %v468, %v472
        %v477 = vand.u32 2147483647, %v467
        %vm478 = vcmp.eq.f32.partialorder %v477, 8.507059e+37
        %v479 = vand.u32 %v467, 2147483648
        %v480 = vor.u32 1.1754944e-38, %v479
        %v481 = vsel %vm478, %v480, %v476
        %v482 = vmul.f32 1.0, %v481
        %v483 = vperm.slane %v482, 0
        %v484 = vlaneseq
        %v485 = vshrl.u32 %v484, 7
        %487 = vset.pattern.permute.xlu0 %v485
        %488 = vperm.xlu0 %487, %v483
        %v489 = vpop.permute.xlu0 %488
        %v490 = vlaneseq
        %v491 = vshrl.u32 %v490, 7
        %v492 = vadd.s32 %v491, 8
        %493 = vset.pattern.permute.xlu0 %v492
        %494 = vperm.xlu0 %493, %v483
        %v495 = vpop.permute.xlu0 %494
        %v496 = vlaneseq
        %v497 = vshrl.u32 %v496, 7
        %v498 = vadd.s32 %v497, 16
        %499 = vset.pattern.permute.xlu0 %v498
        %500 = vperm.xlu0 %499, %v483
        %v501 = vpop.permute.xlu0 %500
        %v502 = vlaneseq
        %v503 = vshrl.u32 %v502, 7
        %v504 = vadd.s32 %v503, 24
        %505 = vset.pattern.permute.xlu0 %v504
        %506 = vperm.xlu0 %505, %v483
        %v507 = vpop.permute.xlu0 %506
        %v508 = vperm.slane %v482, 1
        %v509 = vlaneseq
        %v510 = vshrl.u32 %v509, 7
        %512 = vset.pattern.permute.xlu0 %v510
        %513 = vperm.xlu0 %512, %v508
        %v514 = vpop.permute.xlu0 %513
        %v515 = vlaneseq
        %v516 = vshrl.u32 %v515, 7
        %v517 = vadd.s32 %v516, 8
        %518 = vset.pattern.permute.xlu0 %v517
        %519 = vperm.xlu0 %518, %v508
        %v520 = vpop.permute.xlu0 %519
        %v521 = vlaneseq
        %v522 = vshrl.u32 %v521, 7
        %v523 = vadd.s32 %v522, 16
        %524 = vset.pattern.permute.xlu0 %v523
        %525 = vperm.xlu0 %524, %v508
        %v526 = vpop.permute.xlu0 %525
        %v527 = vlaneseq
        %v528 = vshrl.u32 %v527, 7
        %v529 = vadd.s32 %v528, 24
        %530 = vset.pattern.permute.xlu0 %v529
        %531 = vperm.xlu0 %530, %v508
        %v532 = vpop.permute.xlu0 %531
        %v533 = vmul.f32 %v248, %v489
        %v534 = vmul.f32 %v249, %v489
        %v535 = vmul.f32 %v250, %v495
        %v536 = vmul.f32 %v251, %v495
        %v537 = vmul.f32 %v252, %v501
        %v538 = vmul.f32 %v253, %v501
        %v539 = vmul.f32 %v254, %v507
        %v540 = vmul.f32 %v255, %v507
        %v541 = vmul.f32 %v256, %v514
        %v542 = vmul.f32 %v257, %v514
        %v543 = vmul.f32 %v258, %v520
        %v544 = vmul.f32 %v259, %v520
        %v545 = vmul.f32 %v260, %v526
        %v546 = vmul.f32 %v261, %v526
        %v547 = vmul.f32 %v262, %v532
        %v548 = vmul.f32 %v263, %v532
        %549 = vst [vmem:[%s245] sm:$0xff] %v533
        %550 = vst [vmem:[%s245 + $0x8] sm:$0xff] %v534
        %551 = vst [vmem:[%s245 + $0x10] sm:$0xff] %v535
        %552 = vst [vmem:[%s245 + $0x18] sm:$0xff] %v536
        %553 = vst [vmem:[%s245 + $0x20] sm:$0xff] %v537
        %554 = vst [vmem:[%s245 + $0x28] sm:$0xff] %v538
        %555 = vst [vmem:[%s245 + $0x30] sm:$0xff] %v539
        %556 = vst [vmem:[%s245 + $0x38] sm:$0xff] %v540
        %557 = vst [vmem:[%s245 + $0x40] sm:$0xff] %v541
        %558 = vst [vmem:[%s245 + $0x48] sm:$0xff] %v542
        %559 = vst [vmem:[%s245 + $0x50] sm:$0xff] %v543
        %560 = vst [vmem:[%s245 + $0x58] sm:$0xff] %v544
        %561 = vst [vmem:[%s245 + $0x60] sm:$0xff] %v545
        %562 = vst [vmem:[%s245 + $0x68] sm:$0xff] %v546
        %563 = vst [vmem:[%s245 + $0x70] sm:$0xff] %v547
        %564 = vst [vmem:[%s245 + $0x78] sm:$0xff] %v548
        %s565 = sand.u32 %s140, 1
        %s566 = scalar_lea.sflag [#allocation4], %s565
        %s567 = sand.u32 %s140, 1
        %s568 = smul.addr %s567, 128
        %s569 = scalar_lea.vmem [#allocation5], %s568
        // Predicated region
        $region45: #{tpu_custom_call.1} parent=39 // pred_check
          %p570 = pneg %p150
        $region46: #{tpu_custom_call.1} parent=39 // pred_check_branch
          %572 = sbr.rel (%p570) target = $region48
        $region47: #{tpu_custom_call.1} parent=39 // pred_region
          %s573 = smul.u32 2, %s22
          %575 = vsyncadd %s566, 0
          %s576 = smul.addr %s573, 8
          %s577 = smul.addr %s576, 8
          %s578 = scalar_lea.hbm %s5, %s577
          %s579 = sshll.u32 %s569, 4
          %s580 = int_to_ptr.vmem [resolvable:$true] %s579
          %s581 = sshll.u32 %s578, 4
          %s582 = int_to_ptr.hbm [resolvable:$true] %s581
          %587 = dma.vmem_to_hbm [thread:$0]  %s580, 2048, %s582, %s566, 256, 256, 16
        $region48: #{tpu_custom_call.1} parent=39 // pred_fallthru
          _
      $region40: #{tpu_custom_call.1} parent=5 // pred_fallthru
        _
      %p588 = scmp.le.s32.totalorder 2, %s17
      // Predicated region
      $region49: #{tpu_custom_call.1} parent=5 // pred_check
        %p589 = pneg %p588
      $region50: #{tpu_custom_call.1} parent=5 // pred_check_branch
        %591 = sbr.rel (%p589) target = $region52
      $region51: #{tpu_custom_call.1} parent=5 // pred_region
        %s592 = ssub.s32 %s17, 2
        // Predicated region
        $region53: #{tpu_custom_call.1} parent=51 // pred_check
          %p593 = pneg %p156
        $region54: #{tpu_custom_call.1} parent=51 // pred_check_branch
          %595 = sbr.rel (%p593) target = $region56
        $region55: #{tpu_custom_call.1} parent=51 // pred_region
          %s596 = sand.u32 %s141, 1
          %s597 = scalar_lea.sflag [#allocation4], %s596
          %s598 = sand.u32 %s141, 1
          %s599 = smul.addr %s598, 128
          %s600 = scalar_lea.vmem [#allocation5], %s599
          %602 = dma.done %s597, 2048
        $region56: #{tpu_custom_call.1} parent=51 // pred_fallthru
          _
      $region52: #{tpu_custom_call.1} parent=5 // pred_fallthru
        _
    $region6: #{tpu_custom_call.1} parent=1 // loop_footer
      %s21 = sadd.s32 1, %s17
    $region7: #{tpu_custom_call.1} parent=1 // loop_footer_branch
      %16 = sbr.rel target = $region3
    $region8: #{tpu_custom_call.1} parent=1 // loop_exit
      _
    %603 = vsyncpa [#allocation3], 1
    %s604 = scalar_lea.sflag [#allocation3], 1
    %605 = vsyncpa %s604, 1
    %606 = vsyncpa [#allocation4], 1
    %s607 = scalar_lea.sflag [#allocation4], 1
    %608 = vsyncpa %s607, 1

</llo_original>
